<compile_context>
chip_gen: v6e
topology: v6e:2x2x1
jax: 0.10.0
libtpu: 0.0.40
codegen_flags: <defaults>
</compile_context>

<pallas_src>
import jax
import jax.numpy as jnp
from jax.experimental import pallas as pl
from jax.experimental.pallas import tpu as pltpu

HID_PAD = 128  # hidden 50 padded to one full lane width
OUT_PAD = 128  # classes 10 padded to one full lane width


def _round_up(n, m):
    return ((n + m - 1) // m) * m


def mlp_kernel(x_ref, w1_ref, b1_ref, w2_ref, b2_ref, o_ref):
    # fc1 (bf16 x bf16 on the MXU, f32 accumulate) + bias + ReLU in f32 vregs
    h = jnp.dot(x_ref[...], w1_ref[...], preferred_element_type=jnp.float32)
    h = jnp.maximum(h + b1_ref[...], 0.0)          # b1 is (1, HID_PAD) f32, broadcasts
    # fc2 (f32 x f32, tiny) + bias, then cast to the (bf16) output block dtype
    out = jnp.dot(h, w2_ref[...], preferred_element_type=jnp.float32)
    o_ref[...] = (out + b2_ref[...]).astype(o_ref.dtype)


def pad_params(w1, b1, w2, b2):
    """Lane-pad + cast parameters ONCE (call at init time, not per forward).

    w1: (784, 50), b1: (50,), w2: (50, 10), b2: (10,)  ->  padded, kernel-ready.
    Padded W2 rows / bias columns are zero, so the math is exact.
    """
    in_dim, hid = w1.shape
    out_dim = w2.shape[1]
    w1_p = jnp.zeros((in_dim, HID_PAD), jnp.bfloat16).at[:, :hid].set(
        w1.astype(jnp.bfloat16))
    b1_p = jnp.zeros((1, HID_PAD), jnp.float32).at[:, :hid].set(
        b1.reshape(1, hid).astype(jnp.float32))
    w2_p = jnp.zeros((HID_PAD, OUT_PAD), jnp.float32).at[:hid, :out_dim].set(
        w2.astype(jnp.float32))
    b2_p = jnp.zeros((1, OUT_PAD), jnp.float32).at[:, :out_dim].set(
        b2.reshape(1, out_dim).astype(jnp.float32))
    return w1_p, b1_p, w2_p, b2_p


def network_forward(x, padded_params, *, out_dim=10, block_b=1024,
                    vmem_limit_bytes=32 << 20):
    """x: (B, 784); padded_params from pad_params(). Returns (B, out_dim) bf16 logits."""
    w1_p, b1_p, w2_p, b2_p = padded_params
    B, in_dim = x.shape

    # Dominant HBM stream in bf16 (pass bf16 x from the caller to skip this convert).
    if x.dtype != jnp.bfloat16:
        x = x.astype(jnp.bfloat16)

    # Batch tile: multiple of 8 sublanes, capped so the grid has >=2 steps when
    # possible (keeps both v7x TensorCores busy), and capped by block_b for VMEM.
    tb = max(8, min(block_b, _round_up(-(-B // 2), 8)))
    grid = (pl.cdiv(B, tb),)   # partial last block: OOB reads harmless, writes masked

    b_eff = grid[0] * tb
    flops = 2 * b_eff * (in_dim * HID_PAD + HID_PAD * OUT_PAD)
    bytes_accessed = (2 * b_eff * in_dim                 # x (bf16)
                      + 2 * in_dim * HID_PAD             # w1 (bf16)
                      + 4 * (HID_PAD + HID_PAD * OUT_PAD + OUT_PAD)  # b1, w2, b2 (f32)
                      + 2 * b_eff * OUT_PAD)             # out (bf16)

    y_pad = pl.pallas_call(
        mlp_kernel,
        out_shape=jax.ShapeDtypeStruct((B, OUT_PAD), jnp.bfloat16),
        grid_spec=pltpu.PrefetchScalarGridSpec(
            num_scalar_prefetch=0,
            grid=grid,
            in_specs=[
                pl.BlockSpec((tb, in_dim), lambda i: (i, 0)),       # x walks the batch
                pl.BlockSpec((in_dim, HID_PAD), lambda i: (0, 0)),  # weights stay resident
                pl.BlockSpec((1, HID_PAD), lambda i: (0, 0)),
                pl.BlockSpec((HID_PAD, OUT_PAD), lambda i: (0, 0)),
                pl.BlockSpec((1, OUT_PAD), lambda i: (0, 0)),
            ],
            out_specs=pl.BlockSpec((tb, OUT_PAD), lambda i: (i, 0)),
        ),
        compiler_params=pltpu.CompilerParams(
            dimension_semantics=("parallel",),     # independent batch tiles (2 TCs on v7x)
            vmem_limit_bytes=vmem_limit_bytes,     # headroom for block_b up to ~2048
        ),
        cost_estimate=pl.CostEstimate(
            flops=flops, transcendentals=0, bytes_accessed=bytes_accessed),
    )(x, w1_p, b1_p, w2_p, b2_p)

    # Drop lane padding only (no batch padding was added). Ideally the consumer
    # (softmax/argmax/loss) reads this slice directly so it fuses away.
    return y_pad[:, :out_dim]


if __name__ == "__main__":
    input_size = 784
    hidden = 50
    num_classes = 10
    batch = 20  # not a multiple of the tile -> exercises >=2 grid steps + partial block

    key = jax.random.PRNGKey(0)
    kx, kw1, kb1, kw2, kb2 = jax.random.split(key, 5)

    # PyTorch-style uniform(-1/sqrt(fan_in), +1/sqrt(fan_in)) init
    bound1 = 1.0 / jnp.sqrt(float(input_size))
    bound2 = 1.0 / jnp.sqrt(float(hidden))
    w1 = jax.random.uniform(kw1, (input_size, hidden), jnp.float32, -bound1, bound1)
    b1 = jax.random.uniform(kb1, (hidden,), jnp.float32, -bound1, bound1)
    w2 = jax.random.uniform(kw2, (hidden, num_classes), jnp.float32, -bound2, bound2)
    b2 = jax.random.uniform(kb2, (num_classes,), jnp.float32, -bound2, bound2)

    x = jax.random.normal(kx, (batch, input_size), jnp.float32)

    # Pad/cast parameters once (init-time), then run the forward.
    params = pad_params(w1, b1, w2, b2)
    fwd = jax.jit(network_forward)
    y = fwd(x, params)
    jax.block_until_ready(y)

    # Pure-JAX reference using the same bf16-cast x / W1 (matches kernel numerics).
    xb = x.astype(jnp.bfloat16).astype(jnp.float32)
    w1b = w1.astype(jnp.bfloat16).astype(jnp.float32)
    ref = jnp.maximum(xb @ w1b + b1[None, :], 0.0) @ w2 + b2[None, :]

    assert y.shape == (batch, num_classes)
    assert jnp.allclose(y.astype(jnp.float32), ref, atol=3e-2, rtol=3e-2)

    print("KERNEL_OK")
</pallas_src>

<mosaic_0001>
module attributes {stable_mosaic.version = 11 : i64} {
  func.func @mlp_kernel(%arg0: i32, %arg1: memref<16x784xbf16, #tpu.memory_space<vmem>>, %arg2: memref<784x128xbf16, #tpu.memory_space<vmem>>, %arg3: memref<1x128xf32, #tpu.memory_space<vmem>>, %arg4: memref<128x128xf32, #tpu.memory_space<vmem>>, %arg5: memref<1x128xf32, #tpu.memory_space<vmem>>, %arg6: memref<16x128xbf16, #tpu.memory_space<vmem>>) attributes {dimension_semantics = [#tpu.dimension_semantics<parallel>], iteration_bounds = array<i64: 2>, scalar_prefetch = 0 : i64, scratch_operands = 0 : i64, tpu.core_type = #tpu.core_type<tc>, window_params = [{transform_indices = @transform_0, window_bounds = array<i64: 16, 784>}, {pipeline_mode = #tpu.pipeline_mode<synchronous>, transform_indices = @transform_1, window_bounds = array<i64: 784, 128>}, {pipeline_mode = #tpu.pipeline_mode<synchronous>, transform_indices = @transform_2, window_bounds = array<i64: 1, 128>}, {pipeline_mode = #tpu.pipeline_mode<synchronous>, transform_indices = @transform_3, window_bounds = array<i64: 128, 128>}, {pipeline_mode = #tpu.pipeline_mode<synchronous>, transform_indices = @transform_4, window_bounds = array<i64: 1, 128>}, {transform_indices = @transform_5, window_bounds = array<i64: 16, 128>}]} {
    %c0 = arith.constant 0 : index
    %c0_0 = arith.constant 0 : index
    %0 = vector.load %arg1[%c0, %c0_0] : memref<16x784xbf16, #tpu.memory_space<vmem>>, vector<16x784xbf16>
    %c0_1 = arith.constant 0 : index
    %c0_2 = arith.constant 0 : index
    %1 = vector.load %arg2[%c0_1, %c0_2] : memref<784x128xbf16, #tpu.memory_space<vmem>>, vector<784x128xbf16>
    %cst = arith.constant dense<0.000000e+00> : vector<16x128xf32>
    %2 = tpu.matmul %0, %1, %cst {dimension_numbers = #tpu.dot_dimension_numbers<[1], [0], [0], [1], [0, 0, 1, 1], [], []>} : vector<16x784xbf16>, vector<784x128xbf16>, vector<16x128xf32> -> vector<16x128xf32>
    %c0_3 = arith.constant 0 : index
    %c0_4 = arith.constant 0 : index
    %3 = vector.load %arg3[%c0_3, %c0_4] : memref<1x128xf32, #tpu.memory_space<vmem>>, vector<1x128xf32>
    %4 = vector.broadcast %3 : vector<1x128xf32> to vector<16x128xf32>
    %5 = arith.addf %2, %4 : vector<16x128xf32>
    %cst_5 = arith.constant 0.000000e+00 : f32
    %6 = vector.broadcast %cst_5 : f32 to vector<16x128xf32>
    %7 = arith.maximumf %5, %6 : vector<16x128xf32>
    %c0_6 = arith.constant 0 : index
    %c0_7 = arith.constant 0 : index
    %8 = vector.load %arg4[%c0_6, %c0_7] : memref<128x128xf32, #tpu.memory_space<vmem>>, vector<128x128xf32>
    %cst_8 = arith.constant dense<0.000000e+00> : vector<16x128xf32>
    %9 = tpu.matmul %7, %8, %cst_8 {dimension_numbers = #tpu.dot_dimension_numbers<[1], [0], [0], [1], [0, 0, 1, 1], [], []>} : vector<16x128xf32>, vector<128x128xf32>, vector<16x128xf32> -> vector<16x128xf32>
    %c0_9 = arith.constant 0 : index
    %c0_10 = arith.constant 0 : index
    %10 = vector.load %arg5[%c0_9, %c0_10] : memref<1x128xf32, #tpu.memory_space<vmem>>, vector<1x128xf32>
    %11 = vector.broadcast %10 : vector<1x128xf32> to vector<16x128xf32>
    %12 = arith.addf %9, %11 : vector<16x128xf32>
    %13 = arith.truncf %12 : vector<16x128xf32> to vector<16x128xbf16>
    %c0_11 = arith.constant 0 : index
    %c0_12 = arith.constant 0 : index
    %14 = vector.load %arg6[%c0_11, %c0_12] : memref<16x128xbf16, #tpu.memory_space<vmem>>, vector<16x128xbf16>
    tpu.vector_store %arg6[%c0_11, %c0_12], %13 {strides = array<i32>} : memref<16x128xbf16, #tpu.memory_space<vmem>>, vector<16x128xbf16>,
    return
  }
  func.func @transform_0(%arg0: i32) -> (i32, i32) {
    %c0_i32 = arith.constant 0 : i32
    %c0_i32_0 = arith.constant 0 : i32
    return %arg0, %c0_i32 : i32, i32
  }
  func.func @transform_1(%arg0: i32) -> (i32, i32) {
    %c0_i32 = arith.constant 0 : i32
    %c0_i32_0 = arith.constant 0 : i32
    %c0_i32_1 = arith.constant 0 : i32
    return %c0_i32, %c0_i32_0 : i32, i32
  }
  func.func @transform_2(%arg0: i32) -> (i32, i32) {
    %c0_i32 = arith.constant 0 : i32
    %c0_i32_0 = arith.constant 0 : i32
    %c0_i32_1 = arith.constant 0 : i32
    return %c0_i32, %c0_i32_0 : i32, i32
  }
  func.func @transform_3(%arg0: i32) -> (i32, i32) {
    %c0_i32 = arith.constant 0 : i32
    %c0_i32_0 = arith.constant 0 : i32
    %c0_i32_1 = arith.constant 0 : i32
    return %c0_i32, %c0_i32_0 : i32, i32
  }
  func.func @transform_4(%arg0: i32) -> (i32, i32) {
    %c0_i32 = arith.constant 0 : i32
    %c0_i32_0 = arith.constant 0 : i32
    %c0_i32_1 = arith.constant 0 : i32
    return %c0_i32, %c0_i32_0 : i32, i32
  }
  func.func @transform_5(%arg0: i32) -> (i32, i32) {
    %c0_i32 = arith.constant 0 : i32
    %c0_i32_0 = arith.constant 0 : i32
    return %arg0, %c0_i32 : i32, i32
  }
}

</mosaic_0001>

<llo_original>
// kernel: network_forward.1
$region0: #{network_forward.1}
  #allocation0 [shape = 'u32[]', space=smem, size = 0x4, offset = 0x4, fixed_abs, tag = 'smem constant byte address 0x4 - core index']
  #allocation1 [shape = 'u32[144,128]{1,0:T(1,128)}', space=vmem, size = 0x12000, scoped, tag = 'internal scratch']
  %s0 = inlined_call_operand.vmem [shape: bf16[20,784], index: 0, kind: input, shape index: {}]
  %s1 = inlined_call_operand.hbm [shape: bf16[784,128], index: 1, kind: input, shape index: {}]
  %s2 = inlined_call_operand.vmem [shape: f32[1,128], index: 2, kind: input, shape index: {}]
  %s3 = inlined_call_operand.vmem [shape: f32[128,128], index: 3, kind: input, shape index: {}]
  %s4 = inlined_call_operand.vmem [shape: f32[1,128], index: 4, kind: input, shape index: {}]
  %s5 = inlined_call_operand.vmem [shape: bf16[20,128], index: 5, kind: output, shape index: {}]
  %s6 = sld [smem:[#allocation0]]
  $region101: #{network_forward.1} parent=0
    _
  %s8 = ssub.s32 1, %s6
  %s9 = scalar_select 0, %s8, %s6
  $region1: #{network_forward.1} parent=0
    #allocation2 [shape = 'u8[200704]{0}', space=vmem, size = 0x31000, scoped, tag = 'input window, operand 1, single buffered']
    #allocation3 [shape = 's32[2]{0}', space=sflag, size = 0x8, scoped, tag = 'scoped memory for network_forward.1']
    #allocation4 [shape = 'u8[8192]{0}', space=vmem, size = 0x2000, scoped, tag = 'output window, operand 0']
    %10 = vsyncpa [#allocation3], 0
    loop: start=0, step=1, limit=4
    $region2: #{network_forward.1} parent=1 // loop_pre_header
      _
    $region3: #{network_forward.1} parent=1 // loop_header
      %s12 = sphi 0, %s16
      %p13 = scmp.ge.s32.totalorder %s12, 4
      %s22 = sphi 0, %s24
      %s25 = sphi 0, %s22
      %s26 = sphi 0, %s25
      %s42 = sphi 0, %s26
      %s46 = sphi 0, %s46
      %s48 = sphi 0, %s46
      %s49 = sphi 0, %s48
      %s63 = sphi 0, %s49
      %s67 = sphi 0, %s67
      %s69 = sphi 0, %s67
      %s70 = sphi 0, %s69
      %s84 = sphi 0, %s70
      %s88 = sphi 0, %s88
      %s90 = sphi 0, %s88
      %s91 = sphi 0, %s90
      %s105 = sphi 0, %s91
      %s109 = sphi 0, %s109
      %s111 = sphi 0, %s109
      %s112 = sphi 0, %s111
      %s126 = sphi 0, %s112
      %s132 = sphi 0, %s134
      %s135 = sphi 0, %s132
      %s136 = sphi 0, %s135
      %s152 = sphi 0, %s136
    $region4: #{network_forward.1} parent=1 // loop_header_branch
      %15 = sbr.rel (%p13) target = $region8
    $region5: #{network_forward.1} parent=1 // loop_body
      %s17 = ssub.s32 %s12, 1
      %s18 = ssub.s32 %s12, 2
      %s19 = sadd.s32 %s12, 1
      %s20 = ssub.s32 %s12, %s19
      %p21 = scmp.eq.s32.totalorder %s20, 0
      %s23 = sadd.s32 %s22, 1
      %s24 = scalar_select %p21, %s22, %s23
      %p27 = pneg %p21
      %p28 = scmp.eq.s32.totalorder %s12, 1
      %p29 = por %p27, %p28
      %p30 = scmp.ne.s32.totalorder %s22, %s25
      %p31 = scmp.eq.s32.totalorder %s12, 0
      %p32 = por %p30, %p31
      %p33 = scmp.ne.s32.totalorder %s22, %s25
      %p34 = scmp.eq.s32.totalorder %s17, 1
      %p35 = por %p33, %p34
      %p36 = scmp.ne.s32.totalorder %s25, %s26
      %p37 = scmp.eq.s32.totalorder %s17, 0
      %p38 = por %p36, %p37
      %p39 = scmp.ne.s32.totalorder %s25, %s26
      %p40 = scmp.eq.s32.totalorder %s18, 1
      %p41 = por %p39, %p40
      %p43 = scmp.ne.s32.totalorder %s26, %s42
      %p44 = scmp.eq.s32.totalorder %s18, 0
      %p45 = por %p43, %p44
      %s47 = sadd.s32 %s46, 1
      %p50 = scmp.eq.s32.totalorder %s12, 1
      %p51 = scmp.ne.s32.totalorder %s46, %s48
      %p52 = scmp.eq.s32.totalorder %s12, 0
      %p53 = por %p51, %p52
      %p54 = scmp.ne.s32.totalorder %s46, %s48
      %p55 = scmp.eq.s32.totalorder %s17, 1
      %p56 = por %p54, %p55
      %p57 = scmp.ne.s32.totalorder %s48, %s49
      %p58 = scmp.eq.s32.totalorder %s17, 0
      %p59 = por %p57, %p58
      %p60 = scmp.ne.s32.totalorder %s48, %s49
      %p61 = scmp.eq.s32.totalorder %s18, 1
      %p62 = por %p60, %p61
      %p64 = scmp.ne.s32.totalorder %s49, %s63
      %p65 = scmp.eq.s32.totalorder %s18, 0
      %p66 = por %p64, %p65
      %s68 = sadd.s32 %s67, 1
      %p71 = scmp.eq.s32.totalorder %s12, 1
      %p72 = scmp.ne.s32.totalorder %s67, %s69
      %p73 = scmp.eq.s32.totalorder %s12, 0
      %p74 = por %p72, %p73
      %p75 = scmp.ne.s32.totalorder %s67, %s69
      %p76 = scmp.eq.s32.totalorder %s17, 1
      %p77 = por %p75, %p76
      %p78 = scmp.ne.s32.totalorder %s69, %s70
      %p79 = scmp.eq.s32.totalorder %s17, 0
      %p80 = por %p78, %p79
      %p81 = scmp.ne.s32.totalorder %s69, %s70
      %p82 = scmp.eq.s32.totalorder %s18, 1
      %p83 = por %p81, %p82
      %p85 = scmp.ne.s32.totalorder %s70, %s84
      %p86 = scmp.eq.s32.totalorder %s18, 0
      %p87 = por %p85, %p86
      %s89 = sadd.s32 %s88, 1
      %p92 = scmp.eq.s32.totalorder %s12, 1
      %p93 = scmp.ne.s32.totalorder %s88, %s90
      %p94 = scmp.eq.s32.totalorder %s12, 0
      %p95 = por %p93, %p94
      %p96 = scmp.ne.s32.totalorder %s88, %s90
      %p97 = scmp.eq.s32.totalorder %s17, 1
      %p98 = por %p96, %p97
      %p99 = scmp.ne.s32.totalorder %s90, %s91
      %p100 = scmp.eq.s32.totalorder %s17, 0
      %p101 = por %p99, %p100
      %p102 = scmp.ne.s32.totalorder %s90, %s91
      %p103 = scmp.eq.s32.totalorder %s18, 1
      %p104 = por %p102, %p103
      %p106 = scmp.ne.s32.totalorder %s91, %s105
      %p107 = scmp.eq.s32.totalorder %s18, 0
      %p108 = por %p106, %p107
      %s110 = sadd.s32 %s109, 1
      %p113 = scmp.eq.s32.totalorder %s12, 1
      %p114 = scmp.ne.s32.totalorder %s109, %s111
      %p115 = scmp.eq.s32.totalorder %s12, 0
      %p116 = por %p114, %p115
      %p117 = scmp.ne.s32.totalorder %s109, %s111
      %p118 = scmp.eq.s32.totalorder %s17, 1
      %p119 = por %p117, %p118
      %p120 = scmp.ne.s32.totalorder %s111, %s112
      %p121 = scmp.eq.s32.totalorder %s17, 0
      %p122 = por %p120, %p121
      %p123 = scmp.ne.s32.totalorder %s111, %s112
      %p124 = scmp.eq.s32.totalorder %s18, 1
      %p125 = por %p123, %p124
      %p127 = scmp.ne.s32.totalorder %s112, %s126
      %p128 = scmp.eq.s32.totalorder %s18, 0
      %p129 = por %p127, %p128
      %s130 = ssub.s32 %s12, %s19
      %p131 = scmp.eq.s32.totalorder %s130, 0
      %s133 = sadd.s32 %s132, 1
      %s134 = scalar_select %p131, %s132, %s133
      %p137 = pneg %p131
      %p138 = scmp.eq.s32.totalorder %s12, 1
      %p139 = por %p137, %p138
      %p140 = scmp.ne.s32.totalorder %s132, %s135
      %p141 = scmp.eq.s32.totalorder %s12, 0
      %p142 = por %p140, %p141
      %p143 = scmp.ne.s32.totalorder %s132, %s135
      %p144 = scmp.eq.s32.totalorder %s17, 1
      %p145 = por %p143, %p144
      %p146 = scmp.ne.s32.totalorder %s135, %s136
      %p147 = scmp.eq.s32.totalorder %s17, 0
      %p148 = por %p146, %p147
      %p149 = scmp.ne.s32.totalorder %s135, %s136
      %p150 = scmp.eq.s32.totalorder %s18, 1
      %p151 = por %p149, %p150
      %p153 = scmp.ne.s32.totalorder %s136, %s152
      %p154 = scmp.eq.s32.totalorder %s18, 0
      %p155 = por %p153, %p154
      %p156 = scmp.le.s32.totalorder 1, %s12
      %p157 = scmp.lt.s32.totalorder %s12, 3
      %p158 = pnand %p156, %p157
      %p159 = pneg %p158
      // Predicated region
      $region9: #{network_forward.1} parent=5 // pred_check
        _
      $region10: #{network_forward.1} parent=5 // pred_check_branch
        %161 = sbr.rel (%p158) target = $region12
      $region11: #{network_forward.1} parent=5 // pred_region
        %s162 = ssub.s32 %s12, 1
        // Predicated region
        $region13: #{network_forward.1} parent=11 // pred_check
          %p163 = pneg %p59
        $region14: #{network_forward.1} parent=11 // pred_check_branch
          %165 = sbr.rel (%p163) target = $region16
        $region15: #{network_forward.1} parent=11 // pred_region
          %s167 = ssub.s32 6272, 6272
          %168 = vsyncadd [#allocation3], %s167
          %s169 = sshll.u32 [#allocation2], 4
          %s170 = int_to_ptr.vmem [resolvable:$true] %s169
          %175 = dma.hbm_to_vmem [thread:$0]  %s1, 6272, %s170, [#allocation3], 64, 64, 4
        $region16: #{network_forward.1} parent=11 // pred_fallthru
          _
        // Predicated region
        $region17: #{network_forward.1} parent=11 // pred_check
          %p176 = pneg %p80
        $region18: #{network_forward.1} parent=11 // pred_check_branch
          %178 = sbr.rel (%p176) target = $region20
        $region19: #{network_forward.1} parent=11 // pred_region
          _
        $region20: #{network_forward.1} parent=11 // pred_fallthru
          _
        // Predicated region
        $region21: #{network_forward.1} parent=11 // pred_check
          %p179 = pneg %p101
        $region22: #{network_forward.1} parent=11 // pred_check_branch
          %181 = sbr.rel (%p179) target = $region24
        $region23: #{network_forward.1} parent=11 // pred_region
          _
        $region24: #{network_forward.1} parent=11 // pred_fallthru
          _
        // Predicated region
        $region25: #{network_forward.1} parent=11 // pred_check
          %p182 = pneg %p122
        $region26: #{network_forward.1} parent=11 // pred_check_branch
          %184 = sbr.rel (%p182) target = $region28
        $region27: #{network_forward.1} parent=11 // pred_region
          _
        $region28: #{network_forward.1} parent=11 // pred_fallthru
          _
      $region12: #{network_forward.1} parent=5 // pred_fallthru
        _
      %p185 = scmp.lt.s32.totalorder %s12, 2
      // Predicated region
      $region29: #{network_forward.1} parent=5 // pred_check
        %p186 = pneg %p185
      $region30: #{network_forward.1} parent=5 // pred_check_branch
        %188 = sbr.rel (%p186) target = $region32
      $region31: #{network_forward.1} parent=5 // pred_region
        // Predicated region
        $region33: #{network_forward.1} parent=31 // pred_check
          %p189 = pneg %p32
        $region34: #{network_forward.1} parent=31 // pred_check_branch
          %191 = sbr.rel (%p189) target = $region36
        $region35: #{network_forward.1} parent=31 // pred_region
          %s192 = smul.u32 2, %s12
          %s193 = ssub.s32 3, %s192
          %p194 = scmp.lt.s32.totalorder %s193, 2
          %s195 = scalar_select %p194, %s193, 2
          %s196 = smul.u32 64, %s195
          %s197 = smul.u32 %s196, 7
          %p198 = scmp.lt.s32.totalorder %s192, 2
          %s199 = scalar_select %p198, %s192, 2
          %s200 = smul.addr %s199, 7
          %s201 = smul.addr %s200, 4
          %s202 = scalar_lea.vmem %s0, %s201
          %s203 = smul.u32 2, %s12
          %s204 = ssub.s32 3, %s203
          %p205 = scmp.lt.s32.totalorder %s204, 2
          %s206 = scalar_select %p205, %s204, 2
          %s207 = smul.u32 64, %s206
          %s208 = smul.u32 %s207, 7
        $region36: #{network_forward.1} parent=31 // pred_fallthru
          _
      $region32: #{network_forward.1} parent=5 // pred_fallthru
        _
      %p209 = scmp.le.s32.totalorder 1, %s12
      %p210 = scmp.lt.s32.totalorder %s12, 3
      %p211 = pnand %p209, %p210
      %p212 = pneg %p211
      // Predicated region
      $region37: #{network_forward.1} parent=5 // pred_check
        _
      $region38: #{network_forward.1} parent=5 // pred_check_branch
        %214 = sbr.rel (%p211) target = $region40
      $region39: #{network_forward.1} parent=5 // pred_region
        %s215 = ssub.s32 %s12, 1
        // Predicated region
        $region41: #{network_forward.1} parent=39 // pred_check
          %p216 = pneg %p59
        $region42: #{network_forward.1} parent=39 // pred_check_branch
          %218 = sbr.rel (%p216) target = $region44
        $region43: #{network_forward.1} parent=39 // pred_region
          %219 = dma.done [#allocation3], 6272
        $region44: #{network_forward.1} parent=39 // pred_fallthru
          _
        %s220 = smul.u32 2, %s17
        %s221 = ssub.s32 3, %s220
        %p222 = scmp.lt.s32.totalorder %s221, 2
        %s223 = scalar_select %p222, %s221, 2
        %s224 = smul.u32 64, %s223
        %s225 = smul.u32 %s224, 7
        %p226 = scmp.lt.s32.totalorder %s220, 2
        %s227 = scalar_select %p226, %s220, 2
        %s228 = smul.addr %s227, 7
        %s229 = smul.addr %s228, 4
        %s230 = scalar_lea.vmem %s0, %s229
        %p231 = pneg %p38
        %p232 = pneg %p35
        %p233 = pneg %p59
        %p234 = pneg %p56
        %p235 = pneg %p80
        %p236 = pneg %p77
        %p237 = pneg %p101
        %p238 = pneg %p98
        %p239 = pneg %p122
        %p240 = pneg %p119
        %p241 = pneg %p148
        %p242 = pneg %p145
        %s243 = sand.u32 %s135, 1
        %s244 = sand.u32 %s135, 1
        %s245 = smul.addr %s244, 8
        %s246 = scalar_lea.vmem [#allocation4], %s245
        %s247 = smul.u32 2, %s17
        %s248 = ssub.s32 3, %s247
        %p249 = scmp.lt.s32.totalorder %s248, 2
        %s250 = scalar_select %p249, %s248, 2
        %s251 = smul.u32 64, %s250
        %s252 = smul.u32 %s251, 7
        %p253 = scmp.lt.s32.totalorder %s247, 2
        %s254 = scalar_select %p253, %s247, 2
        %s255 = smul.addr %s254, 7
        %s256 = smul.addr %s255, 4
        %s257 = scalar_lea.vmem %s0, %s256
        %s258 = smul.u32 2, %s17
        %s259 = ssub.s32 3, %s258
        %p260 = scmp.lt.s32.totalorder %s259, 2
        %s261 = scalar_select %p260, %s259, 2
        %s262 = smul.u32 64, %s261
        %s263 = smul.u32 %s262, 7
        %s264 = smul.u32 2, %s17
        %s265 = ssub.s32 3, %s264
        %p266 = scmp.lt.s32.totalorder %s265, 2
        %s267 = scalar_select %p266, %s265, 2
        %s268 = smul.u32 64, %s267
        %v270 = vld [vmem:[%s257] sm:$0xff]
        %v271 = vld [vmem:[%s257 + $0x8] sm:$0xff]
        %v272 = vld [vmem:[%s257 + $0x10] sm:$0xff]
        %v273 = vld [vmem:[%s257 + $0x18] sm:$0xf]
        %v274 = vld [vmem:[%s257 + $0x1c] sm:$0xff]
        %v275 = vld [vmem:[%s257 + $0x24] sm:$0xff]
        %v276 = vld [vmem:[%s257 + $0x2c] sm:$0xff]
        %v277 = vld [vmem:[%s257 + $0x34] sm:$0xf]
        %v278 = vld [vmem:[#allocation2] sm:$0xf]
        %v279 = vld [vmem:[#allocation2 + $0x4] sm:$0xf]
        %v280 = vld [vmem:[#allocation2 + $0x8] sm:$0xf]
        %v281 = vld [vmem:[#allocation2 + $0xc] sm:$0xf]
        %v282 = vld [vmem:[#allocation2 + $0x10] sm:$0xf]
        %v283 = vld [vmem:[#allocation2 + $0x14] sm:$0xf]
        %v284 = vld [vmem:[#allocation2 + $0x18] sm:$0xf]
        %v285 = vld [vmem:[#allocation2 + $0x1c] sm:$0xf]
        %v286 = vld [vmem:[#allocation2 + $0x20] sm:$0xf]
        %v287 = vld [vmem:[#allocation2 + $0x24] sm:$0xf]
        %v288 = vld [vmem:[#allocation2 + $0x28] sm:$0xf]
        %v289 = vld [vmem:[#allocation2 + $0x2c] sm:$0xf]
        %v290 = vld [vmem:[#allocation2 + $0x30] sm:$0xf]
        %v291 = vld [vmem:[#allocation2 + $0x34] sm:$0xf]
        %v292 = vld [vmem:[#allocation2 + $0x38] sm:$0xf]
        %v293 = vld [vmem:[#allocation2 + $0x3c] sm:$0xf]
        %v294 = vld [vmem:[#allocation2 + $0x40] sm:$0xf]
        %v295 = vld [vmem:[#allocation2 + $0x44] sm:$0xf]
        %v296 = vld [vmem:[#allocation2 + $0x48] sm:$0xf]
        %v297 = vld [vmem:[#allocation2 + $0x4c] sm:$0xf]
        %v298 = vld [vmem:[#allocation2 + $0x50] sm:$0xf]
        %v299 = vld [vmem:[#allocation2 + $0x54] sm:$0xf]
        %v300 = vld [vmem:[#allocation2 + $0x58] sm:$0xf]
        %v301 = vld [vmem:[#allocation2 + $0x5c] sm:$0xf]
        %v302 = vld [vmem:[#allocation2 + $0x60] sm:$0xf]
        %v303 = vld [vmem:[#allocation2 + $0x64] sm:$0xf]
        %v304 = vld [vmem:[#allocation2 + $0x68] sm:$0xf]
        %v305 = vld [vmem:[#allocation2 + $0x6c] sm:$0xf]
        %v306 = vld [vmem:[#allocation2 + $0x70] sm:$0xf]
        %v307 = vld [vmem:[#allocation2 + $0x74] sm:$0xf]
        %v308 = vld [vmem:[#allocation2 + $0x78] sm:$0xf]
        %v309 = vld [vmem:[#allocation2 + $0x7c] sm:$0xf]
        %v310 = vld [vmem:[#allocation2 + $0x80] sm:$0xf]
        %v311 = vld [vmem:[#allocation2 + $0x84] sm:$0xf]
        %v312 = vld [vmem:[#allocation2 + $0x88] sm:$0xf]
        %v313 = vld [vmem:[#allocation2 + $0x8c] sm:$0xf]
        %v314 = vld [vmem:[#allocation2 + $0x90] sm:$0xf]
        %v315 = vld [vmem:[#allocation2 + $0x94] sm:$0xf]
        %v316 = vld [vmem:[#allocation2 + $0x98] sm:$0xf]
        %v317 = vld [vmem:[#allocation2 + $0x9c] sm:$0xf]
        %v318 = vld [vmem:[#allocation2 + $0xa0] sm:$0xf]
        %v319 = vld [vmem:[#allocation2 + $0xa4] sm:$0xf]
        %v320 = vld [vmem:[#allocation2 + $0xa8] sm:$0xf]
        %v321 = vld [vmem:[#allocation2 + $0xac] sm:$0xf]
        %v322 = vld [vmem:[#allocation2 + $0xb0] sm:$0xf]
        %v323 = vld [vmem:[#allocation2 + $0xb4] sm:$0xf]
        %v324 = vld [vmem:[#allocation2 + $0xb8] sm:$0xf]
        %v325 = vld [vmem:[#allocation2 + $0xbc] sm:$0xf]
        %v326 = vld [vmem:[#allocation2 + $0xc0] sm:$0xf]
        %v327 = vld [vmem:[#allocation2 + $0xc4] sm:$0xf]
        %v328 = vld [vmem:[#allocation2 + $0xc8] sm:$0xf]
        %v329 = vld [vmem:[#allocation2 + $0xcc] sm:$0xf]
        %v330 = vld [vmem:[#allocation2 + $0xd0] sm:$0xf]
        %v331 = vld [vmem:[#allocation2 + $0xd4] sm:$0xf]
        %v332 = vld [vmem:[#allocation2 + $0xd8] sm:$0xf]
        %v333 = vld [vmem:[#allocation2 + $0xdc] sm:$0xf]
        %v334 = vld [vmem:[#allocation2 + $0xe0] sm:$0xf]
        %v335 = vld [vmem:[#allocation2 + $0xe4] sm:$0xf]
        %v336 = vld [vmem:[#allocation2 + $0xe8] sm:$0xf]
        %v337 = vld [vmem:[#allocation2 + $0xec] sm:$0xf]
        %v338 = vld [vmem:[#allocation2 + $0xf0] sm:$0xf]
        %v339 = vld [vmem:[#allocation2 + $0xf4] sm:$0xf]
        %v340 = vld [vmem:[#allocation2 + $0xf8] sm:$0xf]
        %v341 = vld [vmem:[#allocation2 + $0xfc] sm:$0xf]
        %v342 = vld [vmem:[#allocation2 + $0x100] sm:$0xf]
        %v343 = vld [vmem:[#allocation2 + $0x104] sm:$0xf]
        %v344 = vld [vmem:[#allocation2 + $0x108] sm:$0xf]
        %v345 = vld [vmem:[#allocation2 + $0x10c] sm:$0xf]
        %v346 = vld [vmem:[#allocation2 + $0x110] sm:$0xf]
        %v347 = vld [vmem:[#allocation2 + $0x114] sm:$0xf]
        %v348 = vld [vmem:[#allocation2 + $0x118] sm:$0xf]
        %v349 = vld [vmem:[#allocation2 + $0x11c] sm:$0xf]
        %v350 = vld [vmem:[#allocation2 + $0x120] sm:$0xf]
        %v351 = vld [vmem:[#allocation2 + $0x124] sm:$0xf]
        %v352 = vld [vmem:[#allocation2 + $0x128] sm:$0xf]
        %v353 = vld [vmem:[#allocation2 + $0x12c] sm:$0xf]
        %v354 = vld [vmem:[#allocation2 + $0x130] sm:$0xf]
        %v355 = vld [vmem:[#allocation2 + $0x134] sm:$0xf]
        %v356 = vld [vmem:[#allocation2 + $0x138] sm:$0xf]
        %v357 = vld [vmem:[#allocation2 + $0x13c] sm:$0xf]
        %v358 = vld [vmem:[#allocation2 + $0x140] sm:$0xf]
        %v359 = vld [vmem:[#allocation2 + $0x144] sm:$0xf]
        %v360 = vld [vmem:[#allocation2 + $0x148] sm:$0xf]
        %v361 = vld [vmem:[#allocation2 + $0x14c] sm:$0xf]
        %v362 = vld [vmem:[#allocation2 + $0x150] sm:$0xf]
        %v363 = vld [vmem:[#allocation2 + $0x154] sm:$0xf]
        %v364 = vld [vmem:[#allocation2 + $0x158] sm:$0xf]
        %v365 = vld [vmem:[#allocation2 + $0x15c] sm:$0xf]
        %v366 = vld [vmem:[#allocation2 + $0x160] sm:$0xf]
        %v367 = vld [vmem:[#allocation2 + $0x164] sm:$0xf]
        %v368 = vld [vmem:[#allocation2 + $0x168] sm:$0xf]
        %v369 = vld [vmem:[#allocation2 + $0x16c] sm:$0xf]
        %v370 = vld [vmem:[#allocation2 + $0x170] sm:$0xf]
        %v371 = vld [vmem:[#allocation2 + $0x174] sm:$0xf]
        %v372 = vld [vmem:[#allocation2 + $0x178] sm:$0xf]
        %v373 = vld [vmem:[#allocation2 + $0x17c] sm:$0xf]
        %v374 = vld [vmem:[#allocation2 + $0x180] sm:$0xf]
        %v375 = vld [vmem:[#allocation2 + $0x184] sm:$0xf]
        %v376 = vld [vmem:[%s2] sm:$0x1]
        %v378 = vlaneseq
        %v379 = vshrl.u32 %v378, 7
        %v380 = vsub.s32 0, %v379
        %v381 = vrot.slane %v376, %v380
        %v391 = vunpack.c.l.b16 %v270
        %v392 = vunpack.c.h.b16 %v270
        %v393 = vunpack.c.l.b16 %v271
        %v394 = vunpack.c.h.b16 %v271
        %v395 = vunpack.c.l.b16 %v272
        %v396 = vunpack.c.h.b16 %v272
        %v397 = vunpack.c.l.b16 %v273
        %v398 = vunpack.c.l.b16 %v274
        %v399 = vunpack.c.h.b16 %v274
        %v400 = vunpack.c.l.b16 %v275
        %v401 = vunpack.c.h.b16 %v275
        %v402 = vunpack.c.l.b16 %v276
        %v403 = vunpack.c.h.b16 %v276
        %v404 = vunpack.c.l.b16 %v277
        %v405 = vpack.c.b16 %v398, %v391
        %v406 = vpack.c.b16 %v399, %v392
        %v407 = vpack.c.b16 %v400, %v393
        %v408 = vpack.c.b16 %v401, %v394
        %v409 = vpack.c.b16 %v402, %v395
        %v410 = vpack.c.b16 %v403, %v396
        %v411 = vpack.c.b16 %v404, %v397
        %v516 = vunpack.c.l.b16 %v278
        %v517 = vunpack.c.l.b16 %v279
        %v518 = vunpack.c.l.b16 %v280
        %v519 = vunpack.c.l.b16 %v281
        %v520 = vunpack.c.l.b16 %v282
        %v521 = vunpack.c.l.b16 %v283
        %v522 = vunpack.c.l.b16 %v284
        %v523 = vunpack.c.l.b16 %v285
        %v524 = vunpack.c.l.b16 %v286
        %v525 = vunpack.c.l.b16 %v287
        %v526 = vunpack.c.l.b16 %v288
        %v527 = vunpack.c.l.b16 %v289
        %v528 = vunpack.c.l.b16 %v290
        %v529 = vunpack.c.l.b16 %v291
        %v530 = vunpack.c.l.b16 %v292
        %v531 = vunpack.c.l.b16 %v293
        %v532 = vunpack.c.l.b16 %v294
        %v533 = vunpack.c.l.b16 %v295
        %v534 = vunpack.c.l.b16 %v296
        %v535 = vunpack.c.l.b16 %v297
        %v536 = vunpack.c.l.b16 %v298
        %v537 = vunpack.c.l.b16 %v299
        %v538 = vunpack.c.l.b16 %v300
        %v539 = vunpack.c.l.b16 %v301
        %v540 = vunpack.c.l.b16 %v302
        %v541 = vunpack.c.l.b16 %v303
        %v542 = vunpack.c.l.b16 %v304
        %v543 = vunpack.c.l.b16 %v305
        %v544 = vunpack.c.l.b16 %v306
        %v545 = vunpack.c.l.b16 %v307
        %v546 = vunpack.c.l.b16 %v308
        %v547 = vunpack.c.l.b16 %v309
        %v548 = vunpack.c.l.b16 %v310
        %v549 = vunpack.c.l.b16 %v311
        %v550 = vunpack.c.l.b16 %v312
        %v551 = vunpack.c.l.b16 %v313
        %v552 = vunpack.c.l.b16 %v314
        %v553 = vunpack.c.l.b16 %v315
        %v554 = vunpack.c.l.b16 %v316
        %v555 = vunpack.c.l.b16 %v317
        %v556 = vunpack.c.l.b16 %v318
        %v557 = vunpack.c.l.b16 %v319
        %v558 = vunpack.c.l.b16 %v320
        %v559 = vunpack.c.l.b16 %v321
        %v560 = vunpack.c.l.b16 %v322
        %v561 = vunpack.c.l.b16 %v323
        %v562 = vunpack.c.l.b16 %v324
        %v563 = vunpack.c.l.b16 %v325
        %v564 = vunpack.c.l.b16 %v326
        %v565 = vunpack.c.l.b16 %v327
        %v566 = vunpack.c.l.b16 %v328
        %v567 = vunpack.c.l.b16 %v329
        %v568 = vunpack.c.l.b16 %v330
        %v569 = vunpack.c.l.b16 %v331
        %v570 = vunpack.c.l.b16 %v332
        %v571 = vunpack.c.l.b16 %v333
        %v572 = vunpack.c.l.b16 %v334
        %v573 = vunpack.c.l.b16 %v335
        %v574 = vunpack.c.l.b16 %v336
        %v575 = vunpack.c.l.b16 %v337
        %v576 = vunpack.c.l.b16 %v338
        %v577 = vunpack.c.l.b16 %v339
        %v578 = vunpack.c.l.b16 %v340
        %v579 = vunpack.c.l.b16 %v341
        %v580 = vunpack.c.l.b16 %v342
        %v581 = vunpack.c.l.b16 %v343
        %v582 = vunpack.c.l.b16 %v344
        %v583 = vunpack.c.l.b16 %v345
        %v584 = vunpack.c.l.b16 %v346
        %v585 = vunpack.c.l.b16 %v347
        %v586 = vunpack.c.l.b16 %v348
        %v587 = vunpack.c.l.b16 %v349
        %v588 = vunpack.c.l.b16 %v350
        %v589 = vunpack.c.l.b16 %v351
        %v590 = vunpack.c.l.b16 %v352
        %v591 = vunpack.c.l.b16 %v353
        %v592 = vunpack.c.l.b16 %v354
        %v593 = vunpack.c.l.b16 %v355
        %v594 = vunpack.c.l.b16 %v356
        %v595 = vunpack.c.l.b16 %v357
        %v596 = vunpack.c.l.b16 %v358
        %v597 = vunpack.c.l.b16 %v359
        %v598 = vunpack.c.l.b16 %v360
        %v599 = vunpack.c.l.b16 %v361
        %v600 = vunpack.c.l.b16 %v362
        %v601 = vunpack.c.l.b16 %v363
        %v602 = vunpack.c.l.b16 %v364
        %v603 = vunpack.c.l.b16 %v365
        %v604 = vunpack.c.l.b16 %v366
        %v605 = vunpack.c.l.b16 %v367
        %v606 = vunpack.c.l.b16 %v368
        %v607 = vunpack.c.l.b16 %v369
        %v608 = vunpack.c.l.b16 %v370
        %v609 = vunpack.c.l.b16 %v371
        %v610 = vunpack.c.l.b16 %v372
        %v611 = vunpack.c.l.b16 %v373
        %v612 = vunpack.c.l.b16 %v374
        %v613 = vunpack.c.l.b16 %v375
        %v614 = vpack.c.b16 %v517, %v516
        %v615 = vpack.c.b16 %v519, %v518
        %v616 = vpack.c.b16 %v521, %v520
        %v617 = vpack.c.b16 %v523, %v522
        %v618 = vpack.c.b16 %v525, %v524
        %v619 = vpack.c.b16 %v527, %v526
        %v620 = vpack.c.b16 %v529, %v528
        %v621 = vpack.c.b16 %v531, %v530
        %v622 = vpack.c.b16 %v533, %v532
        %v623 = vpack.c.b16 %v535, %v534
        %v624 = vpack.c.b16 %v537, %v536
        %v625 = vpack.c.b16 %v539, %v538
        %v626 = vpack.c.b16 %v541, %v540
        %v627 = vpack.c.b16 %v543, %v542
        %v628 = vpack.c.b16 %v545, %v544
        %v629 = vpack.c.b16 %v547, %v546
        %v630 = vpack.c.b16 %v549, %v548
        %v631 = vpack.c.b16 %v551, %v550
        %v632 = vpack.c.b16 %v553, %v552
        %v633 = vpack.c.b16 %v555, %v554
        %v634 = vpack.c.b16 %v557, %v556
        %v635 = vpack.c.b16 %v559, %v558
        %v636 = vpack.c.b16 %v561, %v560
        %v637 = vpack.c.b16 %v563, %v562
        %v638 = vpack.c.b16 %v565, %v564
        %v639 = vpack.c.b16 %v567, %v566
        %v640 = vpack.c.b16 %v569, %v568
        %v641 = vpack.c.b16 %v571, %v570
        %v642 = vpack.c.b16 %v573, %v572
        %v643 = vpack.c.b16 %v575, %v574
        %v644 = vpack.c.b16 %v577, %v576
        %v645 = vpack.c.b16 %v579, %v578
        %v646 = vpack.c.b16 %v581, %v580
        %v647 = vpack.c.b16 %v583, %v582
        %v648 = vpack.c.b16 %v585, %v584
        %v649 = vpack.c.b16 %v587, %v586
        %v650 = vpack.c.b16 %v589, %v588
        %v651 = vpack.c.b16 %v591, %v590
        %v652 = vpack.c.b16 %v593, %v592
        %v653 = vpack.c.b16 %v595, %v594
        %v654 = vpack.c.b16 %v597, %v596
        %v655 = vpack.c.b16 %v599, %v598
        %v656 = vpack.c.b16 %v601, %v600
        %v657 = vpack.c.b16 %v603, %v602
        %v658 = vpack.c.b16 %v605, %v604
        %v659 = vpack.c.b16 %v607, %v606
        %v660 = vpack.c.b16 %v609, %v608
        %v661 = vpack.c.b16 %v611, %v610
        %v662 = vpack.c.b16 %v613, %v612
        %vm712 = vcmask 130048
        %v714 = vsel %vm712, %v411, 0
        %716 = vmatprep.subr.bf16.mxu0 0
        %717 = vmatpush1.bf16.msra.mxu0 %v621
        %718 = vmatprep.subr.bf16.mxu0 0
        %719 = vmatpush1.bf16.msra.mxu0 %v620
        %720 = vmatprep.subr.bf16.mxu0 0
        %721 = vmatpush1.bf16.msra.mxu0 %v619
        %722 = vmatprep.subr.bf16.mxu0 0
        %723 = vmatpush1.bf16.msra.mxu0 %v618
        %724 = vmatprep.subr.bf16.mxu0 0
        %725 = vmatpush1.bf16.msra.mxu0 %v617
        %726 = vmatprep.subr.bf16.mxu0 0
        %727 = vmatpush1.bf16.msra.mxu0 %v616
        %728 = vmatprep.subr.bf16.mxu0 0
        %729 = vmatpush1.bf16.msra.mxu0 %v615
        %730 = vmatprep.subr.bf16.mxu0 0
        %731 = vmatpush1.bf16.msra.mxu0 %v614
        %732 = vmatprep.subr.bf16.mxu0 0
        %733 = vmatpush2.bf16.msra.mxu0 %v629
        %734 = vmatprep.subr.bf16.mxu0 0
        %735 = vmatpush2.bf16.msra.mxu0 %v628
        %736 = vmatprep.subr.bf16.mxu0 0
        %737 = vmatpush2.bf16.msra.mxu0 %v627
        %738 = vmatprep.subr.bf16.mxu0 0
        %739 = vmatpush2.bf16.msra.mxu0 %v626
        %740 = vmatprep.subr.bf16.mxu0 0
        %741 = vmatpush2.bf16.msra.mxu0 %v625
        %742 = vmatprep.subr.bf16.mxu0 0
        %743 = vmatpush2.bf16.msra.mxu0 %v624
        %744 = vmatprep.subr.bf16.mxu0 0
        %745 = vmatpush2.bf16.msra.mxu0 %v623
        %746 = vmatprep.subr.bf16.mxu0 0
        %747 = vmatpush2.bf16.msra.mxu0 %v622
        %748 = vmatprep.mubr.bf16.mxu0 %v406
        %749 = vmatmul.mubr.bf16.gmra.mxu0 %v405
        %v750 = vpop.f32.mrf.mxu0
        %v751 = vadd.f32 %v381, %v750
        %v752 = vpop.f32.mrf.mxu0
        %v753 = vpop.f32.mrf.mxu0
        %v754 = vadd.f32 %v381, %v753
        %v755 = vpop.f32.mrf.mxu0
        %756 = vdwg.mxu0
        %757 = vmatprep.subr.bf16.mxu0 0
        %758 = vmatpush1.bf16.msra.mxu0 %v637
        %759 = vmatprep.subr.bf16.mxu0 0
        %760 = vmatpush1.bf16.msra.mxu0 %v636
        %761 = vmatprep.subr.bf16.mxu0 0
        %762 = vmatpush1.bf16.msra.mxu0 %v635
        %763 = vmatprep.subr.bf16.mxu0 0
        %764 = vmatpush1.bf16.msra.mxu0 %v634
        %765 = vmatprep.subr.bf16.mxu0 0
        %766 = vmatpush1.bf16.msra.mxu0 %v633
        %767 = vmatprep.subr.bf16.mxu0 0
        %768 = vmatpush1.bf16.msra.mxu0 %v632
        %769 = vmatprep.subr.bf16.mxu0 0
        %770 = vmatpush1.bf16.msra.mxu0 %v631
        %771 = vmatprep.subr.bf16.mxu0 0
        %772 = vmatpush1.bf16.msra.mxu0 %v630
        %773 = vmatprep.subr.bf16.mxu0 0
        %774 = vmatpush2.bf16.msra.mxu0 %v645
        %775 = vmatprep.subr.bf16.mxu0 0
        %776 = vmatpush2.bf16.msra.mxu0 %v644
        %777 = vmatprep.subr.bf16.mxu0 0
        %778 = vmatpush2.bf16.msra.mxu0 %v643
        %779 = vmatprep.subr.bf16.mxu0 0
        %780 = vmatpush2.bf16.msra.mxu0 %v642
        %781 = vmatprep.subr.bf16.mxu0 0
        %782 = vmatpush2.bf16.msra.mxu0 %v641
        %783 = vmatprep.subr.bf16.mxu0 0
        %784 = vmatpush2.bf16.msra.mxu0 %v640
        %785 = vmatprep.subr.bf16.mxu0 0
        %786 = vmatpush2.bf16.msra.mxu0 %v639
        %787 = vmatprep.subr.bf16.mxu0 0
        %788 = vmatpush2.bf16.msra.mxu0 %v638
        %789 = vmatprep.mubr.bf16.mxu0 %v408
        %790 = vmatmul.mubr.bf16.gmra.mxu0 %v407
        %v791 = vpop.f32.mrf.mxu0
        %v792 = vadd.f32 %v751, %v791
        %v793 = vpop.f32.mrf.mxu0
        %v794 = vpop.f32.mrf.mxu0
        %v795 = vadd.f32 %v754, %v794
        %v796 = vpop.f32.mrf.mxu0
        %797 = vdwg.mxu0
        %798 = vmatprep.subr.bf16.mxu0 0
        %799 = vmatpush1.bf16.msra.mxu0 %v653
        %800 = vmatprep.subr.bf16.mxu0 0
        %801 = vmatpush1.bf16.msra.mxu0 %v652
        %802 = vmatprep.subr.bf16.mxu0 0
        %803 = vmatpush1.bf16.msra.mxu0 %v651
        %804 = vmatprep.subr.bf16.mxu0 0
        %805 = vmatpush1.bf16.msra.mxu0 %v650
        %806 = vmatprep.subr.bf16.mxu0 0
        %807 = vmatpush1.bf16.msra.mxu0 %v649
        %808 = vmatprep.subr.bf16.mxu0 0
        %809 = vmatpush1.bf16.msra.mxu0 %v648
        %810 = vmatprep.subr.bf16.mxu0 0
        %811 = vmatpush1.bf16.msra.mxu0 %v647
        %812 = vmatprep.subr.bf16.mxu0 0
        %813 = vmatpush1.bf16.msra.mxu0 %v646
        %814 = vmatprep.subr.bf16.mxu0 0
        %815 = vmatpush2.bf16.msra.mxu0 %v661
        %816 = vmatprep.subr.bf16.mxu0 0
        %817 = vmatpush2.bf16.msra.mxu0 %v660
        %818 = vmatprep.subr.bf16.mxu0 0
        %819 = vmatpush2.bf16.msra.mxu0 %v659
        %820 = vmatprep.subr.bf16.mxu0 0
        %821 = vmatpush2.bf16.msra.mxu0 %v658
        %822 = vmatprep.subr.bf16.mxu0 0
        %823 = vmatpush2.bf16.msra.mxu0 %v657
        %824 = vmatprep.subr.bf16.mxu0 0
        %825 = vmatpush2.bf16.msra.mxu0 %v656
        %826 = vmatprep.subr.bf16.mxu0 0
        %827 = vmatpush2.bf16.msra.mxu0 %v655
        %828 = vmatprep.subr.bf16.mxu0 0
        %829 = vmatpush2.bf16.msra.mxu0 %v654
        %830 = vmatprep.mubr.bf16.mxu0 %v410
        %831 = vmatmul.mubr.bf16.gmra.mxu0 %v409
        %v832 = vpop.f32.mrf.mxu0
        %v833 = vadd.f32 %v792, %v832
        %v834 = vpop.f32.mrf.mxu0
        %v835 = vpop.f32.mrf.mxu0
        %v836 = vadd.f32 %v795, %v835
        %v837 = vpop.f32.mrf.mxu0
        %838 = vdwg.mxu0
        %839 = vmatprep.subr.bf16.mxu0 0
        %840 = vmatpush1.bf16.msra.mxu0 0
        %841 = vmatprep.subr.bf16.mxu0 0
        %842 = vmatpush1.bf16.msra.mxu0 0
        %843 = vmatprep.subr.bf16.mxu0 0
        %844 = vmatpush1.bf16.msra.mxu0 0
        %845 = vmatprep.subr.bf16.mxu0 0
        %846 = vmatpush1.bf16.msra.mxu0 0
        %847 = vmatprep.subr.bf16.mxu0 0
        %848 = vmatpush1.bf16.msra.mxu0 0
        %849 = vmatprep.subr.bf16.mxu0 0
        %850 = vmatpush1.bf16.msra.mxu0 0
        %851 = vmatprep.subr.bf16.mxu0 0
        %852 = vmatpush1.bf16.msra.mxu0 0
        %853 = vmatprep.subr.bf16.mxu0 0
        %854 = vmatpush1.bf16.msra.mxu0 %v662
        %855 = vmatprep.subr.bf16.mxu0 0
        %856 = vmatpush2.bf16.msra.mxu0 0
        %857 = vmatprep.subr.bf16.mxu0 0
        %858 = vmatpush2.bf16.msra.mxu0 0
        %859 = vmatprep.subr.bf16.mxu0 0
        %860 = vmatpush2.bf16.msra.mxu0 0
        %861 = vmatprep.subr.bf16.mxu0 0
        %862 = vmatpush2.bf16.msra.mxu0 0
        %863 = vmatprep.subr.bf16.mxu0 0
        %864 = vmatpush2.bf16.msra.mxu0 0
        %865 = vmatprep.subr.bf16.mxu0 0
        %866 = vmatpush2.bf16.msra.mxu0 0
        %867 = vmatprep.subr.bf16.mxu0 0
        %868 = vmatpush2.bf16.msra.mxu0 0
        %869 = vmatprep.subr.bf16.mxu0 0
        %870 = vmatpush2.bf16.msra.mxu0 0
        %871 = vmatprep.mubr.bf16.mxu0 0
        %872 = vmatmul.mubr.bf16.gmra.mxu0 %v714
        %v873 = vpop.f32.mrf.mxu0
        %v874 = vadd.f32 %v833, %v873
        %v875 = vpop.f32.mrf.mxu0
        %v876 = vpop.f32.mrf.mxu0
        %v877 = vadd.f32 %v836, %v876
        %v878 = vpop.f32.mrf.mxu0
        %879 = vdwg.mxu0
        %v880 = vmax.f32 %v874, 0.0
        %v881 = vmax.f32 %v877, 0.0
        %v882 = vld [vmem:[%s3] sm:$0xff]
        %v883 = vld [vmem:[%s3 + $0x8] sm:$0xff]
        %v884 = vld [vmem:[%s3 + $0x10] sm:$0xff]
        %v885 = vld [vmem:[%s3 + $0x18] sm:$0xff]
        %v886 = vld [vmem:[%s3 + $0x20] sm:$0xff]
        %v887 = vld [vmem:[%s3 + $0x28] sm:$0xff]
        %v888 = vld [vmem:[%s3 + $0x30] sm:$0xff]
        %v889 = vld [vmem:[%s3 + $0x38] sm:$0xff]
        %v890 = vld [vmem:[%s3 + $0x40] sm:$0xff]
        %v891 = vld [vmem:[%s3 + $0x48] sm:$0xff]
        %v892 = vld [vmem:[%s3 + $0x50] sm:$0xff]
        %v893 = vld [vmem:[%s3 + $0x58] sm:$0xff]
        %v894 = vld [vmem:[%s3 + $0x60] sm:$0xff]
        %v895 = vld [vmem:[%s3 + $0x68] sm:$0xff]
        %v896 = vld [vmem:[%s3 + $0x70] sm:$0xff]
        %v897 = vld [vmem:[%s3 + $0x78] sm:$0xff]
        %v898 = vld [vmem:[%s4] sm:$0x1]
        %v900 = vlaneseq
        %v901 = vshrl.u32 %v900, 7
        %v902 = vsub.s32 0, %v901
        %v903 = vrot.slane %v898, %v902
        %905 = vmatprep.subr.mxu0 0.0
        %906 = vmatpush1.msra.mxu0 %v897
        %907 = vmatprep.subr.mxu0 0.0
        %908 = vmatpush1.msra.mxu0 %v896
        %909 = vmatprep.subr.mxu0 0.0
        %910 = vmatpush1.msra.mxu0 %v895
        %911 = vmatprep.subr.mxu0 0.0
        %912 = vmatpush1.msra.mxu0 %v894
        %913 = vmatprep.subr.mxu0 0.0
        %914 = vmatpush1.msra.mxu0 %v893
        %915 = vmatprep.subr.mxu0 0.0
        %916 = vmatpush1.msra.mxu0 %v892
        %917 = vmatprep.subr.mxu0 0.0
        %918 = vmatpush1.msra.mxu0 %v891
        %919 = vmatprep.subr.mxu0 0.0
        %920 = vmatpush1.msra.mxu0 %v890
        %921 = vmatprep.subr.mxu0 0.0
        %922 = vmatpush1.msra.mxu0 %v889
        %923 = vmatprep.subr.mxu0 0.0
        %924 = vmatpush1.msra.mxu0 %v888
        %925 = vmatprep.subr.mxu0 0.0
        %926 = vmatpush1.msra.mxu0 %v887
        %927 = vmatprep.subr.mxu0 0.0
        %928 = vmatpush1.msra.mxu0 %v886
        %929 = vmatprep.subr.mxu0 0.0
        %930 = vmatpush1.msra.mxu0 %v885
        %931 = vmatprep.subr.mxu0 0.0
        %932 = vmatpush1.msra.mxu0 %v884
        %933 = vmatprep.subr.mxu0 0.0
        %934 = vmatpush1.msra.mxu0 %v883
        %935 = vmatprep.subr.mxu0 0.0
        %936 = vmatpush1.msra.mxu0 %v882
        %937 = vmatprep.subr.mxu0 0.0
        %938 = vmatpush2.msra.mxu0 0.0
        %939 = vmatprep.subr.mxu0 0.0
        %940 = vmatpush2.msra.mxu0 0.0
        %941 = vmatprep.subr.mxu0 0.0
        %942 = vmatpush2.msra.mxu0 0.0
        %943 = vmatprep.subr.mxu0 0.0
        %944 = vmatpush2.msra.mxu0 0.0
        %945 = vmatprep.subr.mxu0 0.0
        %946 = vmatpush2.msra.mxu0 0.0
        %947 = vmatprep.subr.mxu0 0.0
        %948 = vmatpush2.msra.mxu0 0.0
        %949 = vmatprep.subr.mxu0 0.0
        %950 = vmatpush2.msra.mxu0 0.0
        %951 = vmatprep.subr.mxu0 0.0
        %952 = vmatpush2.msra.mxu0 0.0
        %953 = vmatprep.subr.mxu0 0.0
        %954 = vmatpush2.msra.mxu0 0.0
        %955 = vmatprep.subr.mxu0 0.0
        %956 = vmatpush2.msra.mxu0 0.0
        %957 = vmatprep.subr.mxu0 0.0
        %958 = vmatpush2.msra.mxu0 0.0
        %959 = vmatprep.subr.mxu0 0.0
        %960 = vmatpush2.msra.mxu0 0.0
        %961 = vmatprep.subr.mxu0 0.0
        %962 = vmatpush2.msra.mxu0 0.0
        %963 = vmatprep.subr.mxu0 0.0
        %964 = vmatpush2.msra.mxu0 0.0
        %965 = vmatprep.subr.mxu0 0.0
        %966 = vmatpush2.msra.mxu0 0.0
        %967 = vmatprep.subr.mxu0 0.0
        %968 = vmatpush2.msra.mxu0 0.0
        %969 = vmatprep.mubr.f32.mxu0 0.0
        %970 = vmatmul.mubr.f32.gmra.mxu0 %v880
        %v971 = vpop.f32.mrf.mxu0
        %v972 = vadd.f32 %v903, %v971
        %v973 = vpop.f32.mrf.mxu0
        %974 = vmatprep.mubr.f32.mxu0 0.0
        %975 = vmatmul.mubr.f32.gmra.mxu0 %v881
        %v976 = vpop.f32.mrf.mxu0
        %v977 = vadd.f32 %v903, %v976
        %v978 = vpop.f32.mrf.mxu0
        %979 = vdwg.mxu0
        %v980 = vpack.c.bf16 %v977, %v972
        %v982 = vunpack.c.l.b16 %v980
        %v983 = vunpack.c.h.b16 %v980
        %v984 = vpack.c.b16 %v982, %v982
        %v985 = vpack.c.b16 %v983, %v983
        %988 = vst [vmem:[%s246] sm:$0xf] %v984
        %989 = vst [vmem:[%s246 + $0x4] sm:$0xf] %v985
        %s990 = sand.u32 %s135, 1
        %s991 = sand.u32 %s135, 1
        %s992 = smul.addr %s991, 8
        %s993 = scalar_lea.vmem [#allocation4], %s992
        // Predicated region
        $region45: #{network_forward.1} parent=39 // pred_check
          %p994 = pneg %p145
        $region46: #{network_forward.1} parent=39 // pred_check_branch
          %996 = sbr.rel (%p994) target = $region48
        $region47: #{network_forward.1} parent=39 // pred_region
          %s997 = smul.u32 2, %s17
          %s998 = ssub.s32 3, %s997
          %p999 = scmp.lt.s32.totalorder %s998, 2
          %s1000 = scalar_select %p999, %s998, 2
          %s1001 = smul.u32 64, %s1000
          %p1002 = scmp.ne.s32.totalorder 0, %s1001
          %s1003 = smul.addr %s997, 4
          %s1004 = scalar_lea.vmem %s5, %s1003
          // Predicated region
          $region49: #{network_forward.1} parent=47 // pred_check
            %p1005 = pneg %p1002
          $region50: #{network_forward.1} parent=47 // pred_check_branch
            %1007 = sbr.rel (%p1005) target = $region52
          $region51: #{network_forward.1} parent=47 // pred_region
            // Predicated region
            $region53: #{network_forward.1} parent=51 // pred_check
              _
            $region54: #{network_forward.1} parent=51 // pred_check_branch
              %1009 = sbr.rel target = $region56
            $region55: #{network_forward.1} parent=51 // pred_region
              // Predicated region
              $region75: #{network_forward.1} parent=55 // pred_check
                _
              $region76: #{network_forward.1} parent=55 // pred_check_branch
                %1061 = sbr.rel (0) target = $region78
              $region77: #{network_forward.1} parent=55 // pred_region
                %s1063 = ssub.s32 16, 1
                %s1064 = sshrl.u32 %s1000, 1
                // While loop
                $region79: #{network_forward.1} parent=77 // loop_pre_header
                  _
                $region80: #{network_forward.1} parent=77 // loop_header
                  %s1066 = sphi 0, %s1068
                  %p1067 = scmp.ge.s32.totalorder %s1066, %s1064
                  %s1071 = sphi 0, %s1080
                  %s1072 = sphi %s993, %s1083
                  %s1073 = sphi %s1004, %s1084
                $region81: #{network_forward.1} parent=77 // loop_header_branch
                  %1070 = sbr.rel (%p1067) target = $region85
                $region82: #{network_forward.1} parent=77 // loop_body
                  %v1074 = vld [vmem:[%s1072] sm:%s1063]
                  %1075 = vst [vmem:[%s1073] sm:%s1063] %v1074
                  %v1076 = vld [vmem:[%s1072 + $0x4] sm:%s1063]
                  %1077 = vst [vmem:[%s1073 + $0x4] sm:%s1063] %v1076
                  %s1078 = sadd.s32 1, %s1071
                  %p1079 = scmp.ge.s32.totalorder %s1078, %s1064
                  %s1080 = scalar_select %p1079, 0, %s1078
                  %s1081 = smul.u32 %s1080, 8
                  %s1082 = smul.u32 %s1080, 8
                  %s1083 = scalar_lea.vmem %s993, %s1081 [#allocation4]
                  %s1084 = scalar_lea.vmem %s1004, %s1082
                $region83: #{network_forward.1} parent=77 // loop_footer
                  %s1068 = sadd.s32 %s1066, 1
                $region84: #{network_forward.1} parent=77 // loop_footer_branch
                  %1065 = sbr.rel target = $region80
                $region85: #{network_forward.1} parent=77 // loop_exit
                  _
                %s1085 = sshrl.u32 %s1000, 1
                %s1086 = sand.u32 %s1000, 1
                %s1087 = smul.u32 %s1085, 2
                %s1088 = smul.u32 4, %s1087
                %s1089 = scalar_lea.vmem %s993, %s1088 [#allocation4]
                %s1090 = smul.u32 4, %s1087
                %s1091 = scalar_lea.vmem %s1004, %s1090
                // While loop
                $region86: #{network_forward.1} parent=77 // loop_pre_header
                  _
                $region87: #{network_forward.1} parent=77 // loop_header
                  %s1093 = sphi 0, %s1095
                  %p1094 = scmp.ge.s32.totalorder %s1093, %s1086
                  %s1098 = sphi 0, %s1105
                  %s1099 = sphi %s1089, %s1108
                  %s1100 = sphi %s1091, %s1109
                $region88: #{network_forward.1} parent=77 // loop_header_branch
                  %1097 = sbr.rel (%p1094) target = $region92
                $region89: #{network_forward.1} parent=77 // loop_body
                  %v1101 = vld [vmem:[%s1099] sm:%s1063]
                  %1102 = vst [vmem:[%s1100] sm:%s1063] %v1101
                  %s1103 = sadd.s32 1, %s1098
                  %p1104 = scmp.ge.s32.totalorder %s1103, %s1086
                  %s1105 = scalar_select %p1104, 0, %s1103
                  %s1106 = smul.u32 %s1105, 4
                  %s1107 = smul.u32 %s1105, 4
                  %s1108 = scalar_lea.vmem %s1089, %s1106 [#allocation4]
                  %s1109 = scalar_lea.vmem %s1091, %s1107
                $region90: #{network_forward.1} parent=77 // loop_footer
                  %s1095 = sadd.s32 %s1093, 1
                $region91: #{network_forward.1} parent=77 // loop_footer_branch
                  %1092 = sbr.rel target = $region87
                $region92: #{network_forward.1} parent=77 // loop_exit
                  _
              $region78: #{network_forward.1} parent=55 // pred_fallthru
                _
            $region56: #{network_forward.1} parent=51 // pred_fallthru
              _
            // Predicated region
            $region57: #{network_forward.1} parent=51 // pred_check
              _
            $region58: #{network_forward.1} parent=51 // pred_check_branch
              %1011 = sbr.rel (0) target = $region60
            $region59: #{network_forward.1} parent=51 // pred_region
              %s1013 = ssub.s32 16, 1
              %s1014 = sshrl.u32 %s1000, 1
              // While loop
              $region61: #{network_forward.1} parent=59 // loop_pre_header
                _
              $region62: #{network_forward.1} parent=59 // loop_header
                %s1016 = sphi 0, %s1018
                %p1017 = scmp.ge.s32.totalorder %s1016, %s1014
                %s1021 = sphi 0, %s1030
                %s1022 = sphi %s993, %s1033
                %s1023 = sphi %s1004, %s1034
              $region63: #{network_forward.1} parent=59 // loop_header_branch
                %1020 = sbr.rel (%p1017) target = $region67
              $region64: #{network_forward.1} parent=59 // loop_body
                %v1024 = vld [vmem:[%s1022] sm:%s1013]
                %1025 = vst [vmem:[%s1023] sm:%s1013] %v1024
                %v1026 = vld [vmem:[%s1022 + $0x4] sm:%s1013]
                %1027 = vst [vmem:[%s1023 + $0x4] sm:%s1013] %v1026
                %s1028 = sadd.s32 1, %s1021
                %p1029 = scmp.ge.s32.totalorder %s1028, %s1014
                %s1030 = scalar_select %p1029, 0, %s1028
                %s1031 = smul.u32 %s1030, 8
                %s1032 = smul.u32 %s1030, 8
                %s1033 = scalar_lea.vmem %s993, %s1031 [#allocation4]
                %s1034 = scalar_lea.vmem %s1004, %s1032
              $region65: #{network_forward.1} parent=59 // loop_footer
                %s1018 = sadd.s32 %s1016, 1
              $region66: #{network_forward.1} parent=59 // loop_footer_branch
                %1015 = sbr.rel target = $region62
              $region67: #{network_forward.1} parent=59 // loop_exit
                _
              %s1035 = sshrl.u32 %s1000, 1
              %s1036 = sand.u32 %s1000, 1
              %s1037 = smul.u32 %s1035, 2
              %s1038 = smul.u32 4, %s1037
              %s1039 = scalar_lea.vmem %s993, %s1038 [#allocation4]
              %s1040 = smul.u32 4, %s1037
              %s1041 = scalar_lea.vmem %s1004, %s1040
              // While loop
              $region68: #{network_forward.1} parent=59 // loop_pre_header
                _
              $region69: #{network_forward.1} parent=59 // loop_header
                %s1043 = sphi 0, %s1045
                %p1044 = scmp.ge.s32.totalorder %s1043, %s1036
                %s1048 = sphi 0, %s1055
                %s1049 = sphi %s1039, %s1058
                %s1050 = sphi %s1041, %s1059
              $region70: #{network_forward.1} parent=59 // loop_header_branch
                %1047 = sbr.rel (%p1044) target = $region74
              $region71: #{network_forward.1} parent=59 // loop_body
                %v1051 = vld [vmem:[%s1049] sm:%s1013]
                %1052 = vst [vmem:[%s1050] sm:%s1013] %v1051
                %s1053 = sadd.s32 1, %s1048
                %p1054 = scmp.ge.s32.totalorder %s1053, %s1036
                %s1055 = scalar_select %p1054, 0, %s1053
                %s1056 = smul.u32 %s1055, 4
                %s1057 = smul.u32 %s1055, 4
                %s1058 = scalar_lea.vmem %s1039, %s1056 [#allocation4]
                %s1059 = scalar_lea.vmem %s1041, %s1057
              $region72: #{network_forward.1} parent=59 // loop_footer
                %s1045 = sadd.s32 %s1043, 1
              $region73: #{network_forward.1} parent=59 // loop_footer_branch
                %1042 = sbr.rel target = $region69
              $region74: #{network_forward.1} parent=59 // loop_exit
                _
            $region60: #{network_forward.1} parent=51 // pred_fallthru
              _
          $region52: #{network_forward.1} parent=47 // pred_fallthru
            _
          %1110 = vnop
        $region48: #{network_forward.1} parent=39 // pred_fallthru
          _
      $region40: #{network_forward.1} parent=5 // pred_fallthru
        _
      %p1111 = scmp.le.s32.totalorder 2, %s12
      // Predicated region
      $region93: #{network_forward.1} parent=5 // pred_check
        %p1112 = pneg %p1111
      $region94: #{network_forward.1} parent=5 // pred_check_branch
        %1114 = sbr.rel (%p1112) target = $region96
      $region95: #{network_forward.1} parent=5 // pred_region
        %s1115 = ssub.s32 %s12, 2
        // Predicated region
        $region97: #{network_forward.1} parent=95 // pred_check
          %p1116 = pneg %p151
        $region98: #{network_forward.1} parent=95 // pred_check_branch
          %1118 = sbr.rel (%p1116) target = $region100
        $region99: #{network_forward.1} parent=95 // pred_region
          %s1119 = sand.u32 %s136, 1
          %s1120 = sand.u32 %s136, 1
          %s1121 = smul.addr %s1120, 8
          %s1122 = scalar_lea.vmem [#allocation4], %s1121
        $region100: #{network_forward.1} parent=95 // pred_fallthru
          _
      $region96: #{network_forward.1} parent=5 // pred_fallthru
        _
    $region6: #{network_forward.1} parent=1 // loop_footer
      %s16 = sadd.s32 1, %s12
    $region7: #{network_forward.1} parent=1 // loop_footer_branch
      %11 = sbr.rel target = $region3
    $region8: #{network_forward.1} parent=1 // loop_exit
      _
    %1123 = vsyncpa [#allocation3], 1
    %s1124 = scalar_lea.sflag [#allocation3], 1
    %1125 = vsyncpa %s1124, 1

</llo_original>
